<compile_context>
chip_gen: v5e
topology: v5e:2x2
jax: 0.10.0
libtpu: 0.0.40
codegen_flags: <defaults>
</compile_context>

<pallas_src>
import jax
import jax.numpy as jnp
import numpy as np
from jax.experimental import pallas as pl
from jax.experimental.pallas import tpu as pltpu

_LANE = 128
_TILE_BUDGET_BYTES = 8 * 1024 * 1024  # target double-buffered input working set


def _dice_partial_kernel(i_ref, t_ref, o_ref, inter_acc, denom_acc):
    # i_ref, t_ref: (TB, C, TN) input/target tile
    # o_ref:        (TB, C, 2)  per-sample [intersection, denominator] sums
    # inter_acc, denom_acc: (TB, C, 1) f32 VMEM accumulators (resident over N)
    n = pl.program_id(1)

    @pl.when(n == 0)
    def _():
        inter_acc[...] = jnp.zeros_like(inter_acc)
        denom_acc[...] = jnp.zeros_like(denom_acc)

    x = i_ref[...].astype(jnp.float32)
    t = t_ref[...].astype(jnp.float32)

    inter_acc[...] += jnp.sum(x * t, axis=-1, keepdims=True)
    denom_acc[...] += (jnp.sum(x, axis=-1, keepdims=True)
                       + jnp.sum(t, axis=-1, keepdims=True))

    @pl.when(n == pl.num_programs(1) - 1)
    def _():
        o_ref[:, :, 0:1] = inter_acc[...]
        o_ref[:, :, 1:2] = denom_acc[...]


def _choose_tiles(B, C, N, itemsize):
    """Pick (TB, TN) and padded (B, N) so tiles fit VMEM and amortize overhead."""
    n_pad = -(-N // _LANE) * _LANE
    # Double-buffered working set for 2 inputs: 2 * 2 * TB * C * TN * itemsize.
    per_n_bytes = 4 * C * itemsize
    max_tn = max(_LANE, (_TILE_BUDGET_BYTES // per_n_bytes) // _LANE * _LANE)
    tn = min(max_tn, n_pad)
    n_pad = -(-n_pad // tn) * tn

    tile_bytes = 4 * C * tn * itemsize
    tb = min(B, max(1, _TILE_BUDGET_BYTES // tile_bytes))
    b_pad = -(-B // tb) * tb
    return tb, tn, b_pad, n_pad


def dice_loss_sample_weighted(inp, tgt, weight):
    """inp, tgt: (B, C, *spatial) arrays; weight: (B, C). Returns scalar loss."""
    smooth = 1.0
    B, C = inp.shape[0], inp.shape[1]
    N = int(np.prod(inp.shape[2:]))

    iflat = inp.reshape(B, C, N)
    tflat = tgt.reshape(B, C, N)

    itemsize = jnp.dtype(iflat.dtype).itemsize
    tb, tn, b_pad, n_pad = _choose_tiles(B, C, N, itemsize)

    if (b_pad, n_pad) != (B, N):
        iflat = jnp.pad(iflat, ((0, b_pad - B), (0, 0), (0, n_pad - N)))
        tflat = jnp.pad(tflat, ((0, b_pad - B), (0, 0), (0, n_pad - N)))

    grid = (b_pad // tb, n_pad // tn)

    sums = pl.pallas_call(
        _dice_partial_kernel,
        out_shape=jax.ShapeDtypeStruct((b_pad, C, 2), jnp.float32),
        grid_spec=pltpu.PrefetchScalarGridSpec(
            num_scalar_prefetch=0,
            grid=grid,
            in_specs=[
                pl.BlockSpec((tb, C, tn), lambda b, n: (b, 0, n)),
                pl.BlockSpec((tb, C, tn), lambda b, n: (b, 0, n)),
            ],
            out_specs=pl.BlockSpec((tb, C, 2), lambda b, n: (b, 0, 0)),
            scratch_shapes=[
                pltpu.VMEM((tb, C, 1), jnp.float32),
                pltpu.VMEM((tb, C, 1), jnp.float32),
            ],
        ),
        compiler_params=pltpu.CompilerParams(
            dimension_semantics=("parallel", "arbitrary"),
            vmem_limit_bytes=32 * 1024 * 1024,
        ),
    )(iflat, tflat)

    sums = sums[:B]                       # drop batch padding
    intersection = sums[..., 0]           # (B, C)
    denominator = sums[..., 1]            # (B, C)

    dice = (2.0 * intersection + smooth) / (denominator + smooth)
    dice = dice * weight.astype(dice.dtype)
    loss_batch = 1.0 - jnp.sum(dice, axis=1)
    return jnp.mean(loss_batch)


def _reference(inp, tgt, weight):
    smooth = 1.0
    B, C = inp.shape[0], inp.shape[1]
    iflat = inp.reshape(B, C, -1)
    tflat = tgt.reshape(B, C, -1)
    intersection = jnp.sum(iflat * tflat, axis=2)
    denominator = jnp.sum(iflat + tflat, axis=2)
    dice = (2.0 * intersection + smooth) / (denominator + smooth)
    dice = dice * weight
    loss_batch = 1.0 - jnp.sum(dice, axis=1)
    return jnp.mean(loss_batch)


if __name__ == "__main__":
    key = jax.random.PRNGKey(0)
    k1, k2, k3 = jax.random.split(key, 3)

    B, C, H, W = 2, 4, 16, 16
    inp = jax.nn.sigmoid(jax.random.normal(k1, (B, C, H, W), dtype=jnp.float32))
    tgt = (jax.random.uniform(k2, (B, C, H, W)) > 0.5).astype(jnp.float32)
    weight = jax.random.uniform(k3, (B, C), dtype=jnp.float32)

    loss = dice_loss_sample_weighted(inp, tgt, weight)
    loss = jax.block_until_ready(loss)

    ref = _reference(inp, tgt, weight)
    np.testing.assert_allclose(np.asarray(loss), np.asarray(ref), rtol=1e-5, atol=1e-5)

    print("KERNEL_OK")
</pallas_src>

<mosaic_0001>
module attributes {stable_mosaic.version = 11 : i64} {
  func.func @_dice_partial_kernel(%arg0: i32, %arg1: i32, %arg2: memref<2x4x256xf32, #tpu.memory_space<vmem>>, %arg3: memref<2x4x256xf32, #tpu.memory_space<vmem>>, %arg4: memref<2x4x2xf32, #tpu.memory_space<vmem>>, %arg5: memref<2x4x1xf32, #tpu.memory_space<vmem>>, %arg6: memref<2x4x1xf32, #tpu.memory_space<vmem>>) attributes {dimension_semantics = [#tpu.dimension_semantics<parallel>, #tpu.dimension_semantics<arbitrary>], iteration_bounds = array<i64: 1, 1>, scalar_prefetch = 0 : i64, scratch_operands = 2 : i64, tpu.core_type = #tpu.core_type<tc>, window_params = [{transform_indices = @transform_0, window_bounds = array<i64: 2, 4, 256>}, {transform_indices = @transform_1, window_bounds = array<i64: 2, 4, 256>}, {transform_indices = @transform_2, window_bounds = array<i64: 2, 4, 2>}]} {
    %c0_i32 = arith.constant 0 : i32
    %0 = arith.cmpi eq, %arg1, %c0_i32 : i32
    %1 = arith.extui %0 : i1 to i32
    %c0_i32_0 = arith.constant 0 : i32
    %2 = arith.cmpi ne, %1, %c0_i32_0 : i32
    scf.if %2 {
      %cst_22 = arith.constant 0.000000e+00 : f32
      %22 = vector.broadcast %cst_22 : f32 to vector<2x4x1xf32>
      %c0_23 = arith.constant 0 : index
      %c0_24 = arith.constant 0 : index
      %c0_25 = arith.constant 0 : index
      %23 = vector.load %arg5[%c0_23, %c0_24, %c0_25] : memref<2x4x1xf32, #tpu.memory_space<vmem>>, vector<2x4x1xf32>
      tpu.vector_store %arg5[%c0_23, %c0_24, %c0_25], %22 {strides = array<i32>} : memref<2x4x1xf32, #tpu.memory_space<vmem>>, vector<2x4x1xf32>,
      %cst_26 = arith.constant 0.000000e+00 : f32
      %24 = vector.broadcast %cst_26 : f32 to vector<2x4x1xf32>
      %c0_27 = arith.constant 0 : index
      %c0_28 = arith.constant 0 : index
      %c0_29 = arith.constant 0 : index
      %25 = vector.load %arg6[%c0_27, %c0_28, %c0_29] : memref<2x4x1xf32, #tpu.memory_space<vmem>>, vector<2x4x1xf32>
      tpu.vector_store %arg6[%c0_27, %c0_28, %c0_29], %24 {strides = array<i32>} : memref<2x4x1xf32, #tpu.memory_space<vmem>>, vector<2x4x1xf32>,
    } else {
    }
    %c0 = arith.constant 0 : index
    %c0_1 = arith.constant 0 : index
    %c0_2 = arith.constant 0 : index
    %3 = vector.load %arg2[%c0, %c0_1, %c0_2] : memref<2x4x256xf32, #tpu.memory_space<vmem>>, vector<2x4x256xf32>
    %c0_3 = arith.constant 0 : index
    %c0_4 = arith.constant 0 : index
    %c0_5 = arith.constant 0 : index
    %4 = vector.load %arg3[%c0_3, %c0_4, %c0_5] : memref<2x4x256xf32, #tpu.memory_space<vmem>>, vector<2x4x256xf32>
    %c0_6 = arith.constant 0 : index
    %c0_7 = arith.constant 0 : index
    %c0_8 = arith.constant 0 : index
    %5 = vector.load %arg5[%c0_6, %c0_7, %c0_8] : memref<2x4x1xf32, #tpu.memory_space<vmem>>, vector<2x4x1xf32>
    %6 = arith.mulf %3, %4 : vector<2x4x256xf32>
    %cst = arith.constant dense<0.000000e+00> : vector<2x4xf32>
    %7 = vector.multi_reduction <add>, %6, %cst [2] : vector<2x4x256xf32> to vector<2x4xf32>
    %8 = vector.shape_cast %7 : vector<2x4xf32> to vector<2x4x1xf32>
    %9 = arith.addf %5, %8 : vector<2x4x1xf32>
    %c0_9 = arith.constant 0 : index
    %c0_10 = arith.constant 0 : index
    %c0_11 = arith.constant 0 : index
    %10 = vector.load %arg5[%c0_9, %c0_10, %c0_11] : memref<2x4x1xf32, #tpu.memory_space<vmem>>, vector<2x4x1xf32>
    tpu.vector_store %arg5[%c0_9, %c0_10, %c0_11], %9 {strides = array<i32>} : memref<2x4x1xf32, #tpu.memory_space<vmem>>, vector<2x4x1xf32>,
    %c0_12 = arith.constant 0 : index
    %c0_13 = arith.constant 0 : index
    %c0_14 = arith.constant 0 : index
    %11 = vector.load %arg6[%c0_12, %c0_13, %c0_14] : memref<2x4x1xf32, #tpu.memory_space<vmem>>, vector<2x4x1xf32>
    %cst_15 = arith.constant dense<0.000000e+00> : vector<2x4xf32>
    %12 = vector.multi_reduction <add>, %3, %cst_15 [2] : vector<2x4x256xf32> to vector<2x4xf32>
    %13 = vector.shape_cast %12 : vector<2x4xf32> to vector<2x4x1xf32>
    %cst_16 = arith.constant dense<0.000000e+00> : vector<2x4xf32>
    %14 = vector.multi_reduction <add>, %4, %cst_16 [2] : vector<2x4x256xf32> to vector<2x4xf32>
    %15 = vector.shape_cast %14 : vector<2x4xf32> to vector<2x4x1xf32>
    %16 = arith.addf %13, %15 : vector<2x4x1xf32>
    %17 = arith.addf %11, %16 : vector<2x4x1xf32>
    %c0_17 = arith.constant 0 : index
    %c0_18 = arith.constant 0 : index
    %c0_19 = arith.constant 0 : index
    %18 = vector.load %arg6[%c0_17, %c0_18, %c0_19] : memref<2x4x1xf32, #tpu.memory_space<vmem>>, vector<2x4x1xf32>
    tpu.vector_store %arg6[%c0_17, %c0_18, %c0_19], %17 {strides = array<i32>} : memref<2x4x1xf32, #tpu.memory_space<vmem>>, vector<2x4x1xf32>,
    %c0_i32_20 = arith.constant 0 : i32
    %19 = arith.cmpi eq, %arg1, %c0_i32_20 : i32
    %20 = arith.extui %19 : i1 to i32
    %c0_i32_21 = arith.constant 0 : i32
    %21 = arith.cmpi ne, %20, %c0_i32_21 : i32
    scf.if %21 {
      %c0_22 = arith.constant 0 : index
      %c0_23 = arith.constant 0 : index
      %c0_24 = arith.constant 0 : index
      %22 = vector.load %arg5[%c0_22, %c0_23, %c0_24] : memref<2x4x1xf32, #tpu.memory_space<vmem>>, vector<2x4x1xf32>
      %c0_25 = arith.constant 0 : index
      %c0_26 = arith.constant 0 : index
      %c0_27 = arith.constant 0 : index
      %23 = vector.load %arg4[%c0_25, %c0_26, %c0_27] : memref<2x4x2xf32, #tpu.memory_space<vmem>>, vector<2x4x1xf32>
      tpu.vector_store %arg4[%c0_25, %c0_26, %c0_27], %22 {strides = array<i32>} : memref<2x4x2xf32, #tpu.memory_space<vmem>>, vector<2x4x1xf32>,
      %c0_28 = arith.constant 0 : index
      %c0_29 = arith.constant 0 : index
      %c0_30 = arith.constant 0 : index
      %24 = vector.load %arg6[%c0_28, %c0_29, %c0_30] : memref<2x4x1xf32, #tpu.memory_space<vmem>>, vector<2x4x1xf32>
      %c0_31 = arith.constant 0 : index
      %c0_32 = arith.constant 0 : index
      %c1 = arith.constant 1 : index
      %25 = vector.load %arg4[%c0_31, %c0_32, %c1] : memref<2x4x2xf32, #tpu.memory_space<vmem>>, vector<2x4x1xf32>
      tpu.vector_store %arg4[%c0_31, %c0_32, %c1], %24 {strides = array<i32>} : memref<2x4x2xf32, #tpu.memory_space<vmem>>, vector<2x4x1xf32>,
    } else {
    }
    return
  }
  func.func @transform_0(%arg0: i32, %arg1: i32) -> (i32, i32, i32) {
    %c0_i32 = arith.constant 0 : i32
    %c0_i32_0 = arith.constant 0 : i32
    return %arg0, %c0_i32, %arg1 : i32, i32, i32
  }
  func.func @transform_1(%arg0: i32, %arg1: i32) -> (i32, i32, i32) {
    %c0_i32 = arith.constant 0 : i32
    %c0_i32_0 = arith.constant 0 : i32
    return %arg0, %c0_i32, %arg1 : i32, i32, i32
  }
  func.func @transform_2(%arg0: i32, %arg1: i32) -> (i32, i32, i32) {
    %c0_i32 = arith.constant 0 : i32
    %c0_i32_0 = arith.constant 0 : i32
    %c0_i32_1 = arith.constant 0 : i32
    return %arg0, %c0_i32, %c0_i32_0 : i32, i32, i32
  }
}

</mosaic_0001>

<llo_original>
// kernel: tpu_custom_call.1
$region0: #{tpu_custom_call.1}
  #allocation0 [shape = 'u32[]', space=smem, size = 0x4, offset = 0x4, fixed_abs, tag = 'smem constant byte address 0x4 - core index']
  #allocation1 [shape = 'u32[72,128]{1,0:T(1,128)}', space=vmem, size = 0x9000, scoped, tag = 'internal scratch']
  #allocation2 [shape = 'f32[2,4,1]{2,1,0:T(4,128)}', space=vmem, size = 0x1000, scoped, tag = 'scratch operand']
  #allocation3 [shape = 'f32[2,4,1]{2,1,0:T(4,128)}', space=vmem, size = 0x1000, scoped, tag = 'scratch operand']
  %s0 = inlined_call_operand.hbm [shape: f32[2,4,256], index: 0, kind: input, shape index: {}]
  %s1 = inlined_call_operand.hbm [shape: f32[2,4,256], index: 1, kind: input, shape index: {}]
  %s2 = inlined_call_operand.vmem [shape: f32[2,4,2], index: 2, kind: output, shape index: {}]
  %s3 = sld [smem:[#allocation0]]
  $region34: #{tpu_custom_call.1} parent=0
    _
  %s5 = ssub.s32 1, %s3
  %s6 = scalar_select 0, %s5, %s3
  $region1: #{tpu_custom_call.1} parent=0
    #allocation4 [shape = 'u8[8192]{0}', space=vmem, size = 0x2000, scoped, tag = 'input window, operand 0, single buffered']
    #allocation5 [shape = 's32[1]{0}', space=sflag, size = 0x4, scoped, tag = 'scoped memory for tpu_custom_call.1']
    #allocation6 [shape = 'u8[8192]{0}', space=vmem, size = 0x2000, scoped, tag = 'input window, operand 1, single buffered']
    #allocation7 [shape = 's32[1]{0}', space=sflag, size = 0x4, scoped, tag = 'scoped memory for tpu_custom_call.1']
    %7 = vsyncpa [#allocation5], 0
    %8 = vsyncpa [#allocation7], 0
    // Predicated region
    $region2: #{tpu_custom_call.1} parent=1 // pred_check
      _
    $region3: #{tpu_custom_call.1} parent=1 // pred_check_branch
      %10 = sbr.rel (0) target = $region5
    $region4: #{tpu_custom_call.1} parent=1 // pred_region
      %12 = vsyncadd [#allocation5], 0
      %s13 = sshll.u32 %s0, 4
      %s14 = int_to_ptr.hbm [resolvable:$true] %s13
      %s15 = sshll.u32 [#allocation4], 4
      %s16 = int_to_ptr.vmem [resolvable:$true] %s15
      %21 = dma.hbm_to_vmem [thread:$0]  %s14, 256, %s16, [#allocation5], 128, 128, 8
    $region5: #{tpu_custom_call.1} parent=1 // pred_fallthru
      _
    // Predicated region
    $region6: #{tpu_custom_call.1} parent=1 // pred_check
      _
    $region7: #{tpu_custom_call.1} parent=1 // pred_check_branch
      %23 = sbr.rel (0) target = $region9
    $region8: #{tpu_custom_call.1} parent=1 // pred_region
      %25 = vsyncadd [#allocation7], 0
      %s26 = sshll.u32 %s1, 4
      %s27 = int_to_ptr.hbm [resolvable:$true] %s26
      %s28 = sshll.u32 [#allocation6], 4
      %s29 = int_to_ptr.vmem [resolvable:$true] %s28
      %34 = dma.hbm_to_vmem [thread:$0]  %s27, 256, %s29, [#allocation7], 128, 128, 8
    $region9: #{tpu_custom_call.1} parent=1 // pred_fallthru
      _
    // Predicated region
    $region10: #{tpu_custom_call.1} parent=1 // pred_check
      _
    $region11: #{tpu_custom_call.1} parent=1 // pred_check_branch
      %36 = sbr.rel (0) target = $region13
    $region12: #{tpu_custom_call.1} parent=1 // pred_region
      %38 = dma.done [#allocation5], 256
    $region13: #{tpu_custom_call.1} parent=1 // pred_fallthru
      _
    // Predicated region
    $region14: #{tpu_custom_call.1} parent=1 // pred_check
      _
    $region15: #{tpu_custom_call.1} parent=1 // pred_check_branch
      %40 = sbr.rel (0) target = $region17
    $region16: #{tpu_custom_call.1} parent=1 // pred_region
      %42 = dma.done [#allocation7], 256
    $region17: #{tpu_custom_call.1} parent=1 // pred_fallthru
      _
    %p43 = scmp.eq.s32.totalorder 0, 0
    // Predicated region
    $region18: #{tpu_custom_call.1} parent=1 // pred_check
      %p44 = pneg %p43
    $region19: #{tpu_custom_call.1} parent=1 // pred_check_branch
      %46 = sbr.rel (%p44) target = $region21
    $region20: #{tpu_custom_call.1} parent=1 // pred_region
      %vm47 = vcmask 3072
      %48 = vst.msk [vmem:[#allocation2] sm:$0xf] %vm47, 0.0
      %49 = vst.msk [vmem:[#allocation2 + $0x4] sm:$0xf] %vm47, 0.0
      %50 = vst.msk [vmem:[#allocation3] sm:$0xf] %vm47, 0.0
      %51 = vst.msk [vmem:[#allocation3 + $0x4] sm:$0xf] %vm47, 0.0
    $region21: #{tpu_custom_call.1} parent=1 // pred_fallthru
      _
    %v52 = vld [vmem:[#allocation4] sm:$0xff]
    %v53 = vld [vmem:[#allocation4 + $0x8] sm:$0xff]
    %v54 = vld [vmem:[#allocation6] sm:$0xff]
    %v55 = vld [vmem:[#allocation6 + $0x8] sm:$0xff]
    %v56 = vld [vmem:[#allocation2] sm:$0xf]
    %v57 = vld [vmem:[#allocation2 + $0x4] sm:$0xf]
    %v58 = vmul.f32 %v52, %v54
    %v59 = vmul.f32 %v53, %v55
    %62 = vst [vmem:[#allocation1] ss:$2 sm:$0xff] %v58
    %v63 = vld.sshfl [vmem:[#allocation1] sm:$0xff pattern:$0x75316420]
    %v64 = vld.sshfl [vmem:[#allocation1 + $0x8] sm:$0xff pattern:$0x75316420]
    %s65 = scalar_lea.vmem [#allocation1], 16
    %66 = vst [vmem:[%s65] ss:$2 sm:$0xff] %v59
    %v67 = vld.sshfl [vmem:[#allocation1 + $0x10] sm:$0xff pattern:$0x75316420]
    %v68 = vld.sshfl [vmem:[#allocation1 + $0x18] sm:$0xff pattern:$0x75316420]
    %vm73 = vcmask 1043456
    %v74 = vsel %vm73, %v63, 0.0
    %v75 = vsel %vm73, %v64, 0.0
    %v76 = vadd.f32 %v74, %v75
    %77 = vadd.xlane.f32.xlu0 %v76
    %v78 = vpop.xlane.xlu0 %77
    %v79 = vsel %vm73, %v67, 0.0
    %v80 = vsel %vm73, %v68, 0.0
    %v81 = vadd.f32 %v79, %v80
    %82 = vadd.xlane.f32.xlu0 %v81
    %v83 = vpop.xlane.xlu0 %82
    %v84 = vadd.f32 %v56, %v78
    %v85 = vadd.f32 %v57, %v83
    %vm86 = vcmask 3072
    %87 = vst.msk [vmem:[#allocation2] sm:$0xf] %vm86, %v84
    %88 = vst.msk [vmem:[#allocation2 + $0x4] sm:$0xf] %vm86, %v85
    %v89 = vld [vmem:[#allocation3] sm:$0xf]
    %v90 = vld [vmem:[#allocation3 + $0x4] sm:$0xf]
    %93 = vst [vmem:[#allocation1] ss:$2 sm:$0xff] %v52
    %v94 = vld.sshfl [vmem:[#allocation1] sm:$0xff pattern:$0x75316420]
    %v95 = vld.sshfl [vmem:[#allocation1 + $0x8] sm:$0xff pattern:$0x75316420]
    %s96 = scalar_lea.vmem [#allocation1], 16
    %97 = vst [vmem:[%s96] ss:$2 sm:$0xff] %v53
    %v98 = vld.sshfl [vmem:[#allocation1 + $0x10] sm:$0xff pattern:$0x75316420]
    %v99 = vld.sshfl [vmem:[#allocation1 + $0x18] sm:$0xff pattern:$0x75316420]
    %v104 = vsel %vm73, %v94, 0.0
    %v105 = vsel %vm73, %v95, 0.0
    %v106 = vadd.f32 %v104, %v105
    %107 = vadd.xlane.f32.xlu0 %v106
    %v108 = vpop.xlane.xlu0 %107
    %v109 = vsel %vm73, %v98, 0.0
    %v110 = vsel %vm73, %v99, 0.0
    %v111 = vadd.f32 %v109, %v110
    %112 = vadd.xlane.f32.xlu0 %v111
    %v113 = vpop.xlane.xlu0 %112
    %116 = vst [vmem:[#allocation1] ss:$2 sm:$0xff] %v54
    %v117 = vld.sshfl [vmem:[#allocation1] sm:$0xff pattern:$0x75316420]
    %v118 = vld.sshfl [vmem:[#allocation1 + $0x8] sm:$0xff pattern:$0x75316420]
    %s119 = scalar_lea.vmem [#allocation1], 16
    %120 = vst [vmem:[%s119] ss:$2 sm:$0xff] %v55
    %v121 = vld.sshfl [vmem:[#allocation1 + $0x10] sm:$0xff pattern:$0x75316420]
    %v122 = vld.sshfl [vmem:[#allocation1 + $0x18] sm:$0xff pattern:$0x75316420]
    %v127 = vsel %vm73, %v117, 0.0
    %v128 = vsel %vm73, %v118, 0.0
    %v129 = vadd.f32 %v127, %v128
    %130 = vadd.xlane.f32.xlu0 %v129
    %v131 = vpop.xlane.xlu0 %130
    %v132 = vsel %vm73, %v121, 0.0
    %v133 = vsel %vm73, %v122, 0.0
    %v134 = vadd.f32 %v132, %v133
    %135 = vadd.xlane.f32.xlu0 %v134
    %v136 = vpop.xlane.xlu0 %135
    %v137 = vadd.f32 %v108, %v131
    %v138 = vadd.f32 %v113, %v136
    %v139 = vadd.f32 %v89, %v137
    %v140 = vadd.f32 %v90, %v138
    %141 = vst.msk [vmem:[#allocation3] sm:$0xf] %vm86, %v139
    %142 = vst.msk [vmem:[#allocation3 + $0x4] sm:$0xf] %vm86, %v140
    // Predicated region
    $region22: #{tpu_custom_call.1} parent=1 // pred_check
      %p143 = pneg %p43
    $region23: #{tpu_custom_call.1} parent=1 // pred_check_branch
      %145 = sbr.rel (%p143) target = $region25
    $region24: #{tpu_custom_call.1} parent=1 // pred_region
      %v146 = vld [vmem:[#allocation2] sm:$0xf]
      %v147 = vld [vmem:[#allocation2 + $0x4] sm:$0xf]
      %148 = vst.msk [vmem:[%s2] sm:$0xf] %vm86, %v146
      %149 = vst.msk [vmem:[%s2 + $0x4] sm:$0xf] %vm86, %v147
      %v150 = vld [vmem:[#allocation3] sm:$0xf]
      %v151 = vld [vmem:[#allocation3 + $0x4] sm:$0xf]
      %154 = vrot.lane.b32.xlu0 %v150, 1
      %v155 = vpop.permute.xlu0 %154
      %156 = vrot.lane.b32.xlu0 %v151, 1
      %v157 = vpop.permute.xlu0 %156
      %vm160 = vcmask 11272
      %161 = vst.msk [vmem:[%s2] sm:$0xf] %vm160, %v155
      %162 = vst.msk [vmem:[%s2 + $0x4] sm:$0xf] %vm160, %v157
    $region25: #{tpu_custom_call.1} parent=1 // pred_fallthru
      _
    // Predicated region
    $region26: #{tpu_custom_call.1} parent=1 // pred_check
      _
    $region27: #{tpu_custom_call.1} parent=1 // pred_check_branch
      %164 = sbr.rel (0) target = $region29
    $region28: #{tpu_custom_call.1} parent=1 // pred_region
      _
    $region29: #{tpu_custom_call.1} parent=1 // pred_fallthru
      _
    // Predicated region
    $region30: #{tpu_custom_call.1} parent=1 // pred_check
      _
    $region31: #{tpu_custom_call.1} parent=1 // pred_check_branch
      %166 = sbr.rel (0) target = $region33
    $region32: #{tpu_custom_call.1} parent=1 // pred_region
      _
    $region33: #{tpu_custom_call.1} parent=1 // pred_fallthru
      _
    %167 = vsyncpa [#allocation5], 1
    %168 = vsyncpa [#allocation7], 1

</llo_original>
